<compile_context>
chip_gen: v7x
topology: tpu7x:2x2x1
jax: 0.10.0
libtpu: 0.0.40
codegen_flags: <defaults>
</compile_context>

<pallas_src>
import jax
import jax.numpy as jnp
from jax import lax
from jax.experimental import pallas as pl
from jax.experimental.pallas import tpu as pltpu


def _round_up(x, m):
    return ((x + m - 1) // m) * m


def _vmem_capacity_bytes():
    """Best-effort per-core VMEM capacity; conservative 64 MiB fallback."""
    try:
        info = pltpu.get_tpu_info()
        for attr in ("vmem_capacity_bytes", "vmem_size_bytes", "vmem_bytes"):
            val = getattr(info, attr, None)
            if val:
                return int(val)
    except Exception:
        pass
    return 64 << 20  # v7x per-core VMEM; safe lower bound everywhere


def _make_cam_kernel(use_fb_cache):
    def kernel(gamma_ref, x_ref, fb_ref, o_ref, energy_acc, attn_sc, *rest):
        fb_cache = rest[0] if use_fb_cache else None
        ph = pl.program_id(1)               # 0: energy pass, 1: output pass
        n = pl.program_id(2)                # spatial tile index
        last = pl.num_programs(2) - 1

        @pl.when(ph == 0)
        def _energy_pass():
            fb = fb_ref[0]                  # (C, tn), compute dtype (bf16 MXU feed)

            @pl.when(n == 0)
            def _():
                energy_acc[...] = jnp.zeros_like(energy_acc)

            # energy += fb @ fb^T, contraction on axis 1 of BOTH operands so the
            # MXU is fed directly without materializing fb.T.
            energy_acc[...] += lax.dot_general(
                fb, fb,
                dimension_numbers=(((1,), (1,)), ((), ())),
                preferred_element_type=jnp.float32)

            if use_fb_cache:
                fb_cache[n] = fb            # keep the tile for phase 1

            # softmax(rowmax(E) - E) == normalize(exp(rowmin(E) - E)): one
            # cross-lane reduction.  Done at the END of phase 0 so the (C,C)
            # exp (EUP) + reductions (XLU) overlap phase-1's first tile DMAs
            # instead of serializing in front of the first output matmul.
            @pl.when(n == last)
            def _softmax():
                energy = energy_acc[...]
                e_min = jnp.min(energy, axis=-1, keepdims=True)
                e_exp = jnp.exp(e_min - energy)
                denom = jnp.sum(e_exp, axis=-1, keepdims=True)
                attn = e_exp * pl.reciprocal(denom, approx=True)
                attn_sc[...] = attn.astype(attn_sc.dtype)   # bf16 MXU feed

        @pl.when(ph == 1)
        def _output_pass():
            fb = fb_cache[n] if use_fb_cache else fb_ref[0]
            out = jnp.dot(attn_sc[...], fb, preferred_element_type=jnp.float32)
            gamma = gamma_ref[0]            # scalar from SMEM
            # The output block (b,0,0) stays current-but-unwritten through all
            # of phase 0 and gets its first (and only) write here; Pallas only
            # copies output blocks back to HBM on block-index change, so no
            # stale data reaches HBM (exercised by the K>2 test below).
            o_ref[0] = (x_ref[0] + gamma * out).astype(o_ref.dtype)

    return kernel


def cam_module(x, fb, gamma, *, compute_dtype=jnp.bfloat16,
               spatial_tile=None, use_fb_cache=None):
    """x, fb: (B, C, W, H) NCHW as in PyTorch.  gamma: (1,) float parameter."""
    B, C, W, H = x.shape
    assert fb.shape == x.shape
    N = W * H
    compute_dtype = jnp.dtype(compute_dtype)
    x_bytes = jnp.dtype(x.dtype).itemsize
    fb_bytes = compute_dtype.itemsize

    vmem_cap = _vmem_capacity_bytes()

    # ---- lane-dense spatial tiling, sized against the chip's VMEM ----------
    if spatial_tile is not None:
        tn = int(spatial_tile)
        assert tn % 128 == 0, "spatial_tile must be a multiple of 128 lanes"
    else:
        target = 1024 if vmem_cap >= (96 << 20) else 512   # v5e/v6e vs v7x

        def _need(t):   # double-buffered x/fb/out tiles + (C,C) scratches
            return (2 * C * t * (2 * x_bytes + fb_bytes)
                    + C * C * (4 + fb_bytes))

        tn = min(_round_up(N, 128), target)
        while tn > 128 and _need(tn) > int(0.7 * vmem_cap):
            tn -= 128
    N_pad = _round_up(N, tn)                # zero-pad instead of odd tiles
    K = N_pad // tn

    # ---- fb VMEM cache decision (skip second HBM read of fb when it fits) --
    cache_bytes = C * N_pad * fb_bytes
    stream_bytes = 2 * C * tn * (2 * x_bytes + fb_bytes)
    scratch_bytes = C * C * (4 + fb_bytes)
    if use_fb_cache is None:
        use_fb_cache = (
            K > 1   # K == 1: fb block index is identical in both phases anyway
            and cache_bytes <= min(24 << 20, int(0.3 * vmem_cap))
            and stream_bytes + scratch_bytes + cache_bytes <= int(0.7 * vmem_cap))
    use_fb_cache = bool(use_fb_cache)

    need = stream_bytes + scratch_bytes + (cache_bytes if use_fb_cache else 0)
    vmem_limit = int(min(vmem_cap, max(int(need * 1.5) + (4 << 20), 32 << 20)))

    # ---- operands -----------------------------------------------------------
    x_flat = x.reshape(B, C, N)
    fb_flat = fb.reshape(B, C, N).astype(compute_dtype)
    if N_pad != N:
        pad = ((0, 0), (0, 0), (0, N_pad - N))
        x_flat = jnp.pad(x_flat, pad)
        fb_flat = jnp.pad(fb_flat, pad)     # zeros are exact for both matmuls
    gamma = jnp.asarray(gamma, dtype=jnp.float32).reshape((1,))

    scratch_shapes = [
        pltpu.VMEM((C, C), jnp.float32),    # energy accumulator (only f32 RMW)
        pltpu.VMEM((C, C), compute_dtype),  # attention weights (bf16 MXU feed)
    ]
    if use_fb_cache:
        scratch_shapes.append(pltpu.VMEM((K, C, tn), compute_dtype))

    if use_fb_cache:
        # Stream fb during phase 0; pin to the last-seen tile during phase 1
        # (fb_ref is unused there) so no extra fb DMA is issued.
        fb_index = lambda b, ph, n: (b, 0, n * (1 - ph) + (K - 1) * ph)
    else:
        fb_index = lambda b, ph, n: (b, 0, n)

    cost = pl.CostEstimate(
        flops=4 * B * C * C * N_pad,
        transcendentals=B * C * C,
        bytes_accessed=(B * C * N_pad
                        * ((1 if use_fb_cache else 2) * fb_bytes + 2 * x_bytes)
                        + B * C * C * 4))

    # TODO(synk): for B == 1 on v7x, add a "parallel" grid axis over C row
    # blocks (energy/attn scratch shaped (C_block, C)) so the second TensorCore
    # is used; also lets very large C fit the 64 MiB VMEM.
    out_flat = pl.pallas_call(
        _make_cam_kernel(use_fb_cache),
        out_shape=jax.ShapeDtypeStruct((B, C, N_pad), x.dtype),
        grid_spec=pltpu.PrefetchScalarGridSpec(
            num_scalar_prefetch=0,
            grid=(B, 2, K),
            in_specs=[
                pl.BlockSpec(memory_space=pltpu.MemorySpace.SMEM),           # gamma
                # x is only consumed in phase 1: pin its block to 0 in phase 0.
                pl.BlockSpec((1, C, tn), lambda b, ph, n: (b, 0, n * ph)),   # x
                pl.BlockSpec((1, C, tn), fb_index),                          # fb
            ],
            out_specs=pl.BlockSpec((1, C, tn), lambda b, ph, n: (b, 0, n * ph)),
            scratch_shapes=scratch_shapes,
        ),
        compiler_params=pltpu.CompilerParams(
            dimension_semantics=("parallel", "arbitrary", "arbitrary"),
            vmem_limit_bytes=vmem_limit),
        cost_estimate=cost,
        # out = x + gamma*attn_out has x's shape/dtype: reuse x's HBM buffer.
        input_output_aliases={1: 0},
    )(gamma, x_flat, fb_flat)

    if N_pad != N:
        out_flat = out_flat[:, :, :N]
    # TODO(synk): like the PyTorch module (flatten (W,H), view back as (H,W)
    # before the add), non-square spatial inputs are assumed to have W == H.
    return out_flat.reshape(B, C, H, W)


def cam_reference(x, fb, gamma, compute_dtype=None):
    """Pure-JAX reference; compute_dtype mirrors the kernel's MXU-feed casts."""
    B, C, W, H = x.shape
    q = fb.reshape(B, C, -1)
    if compute_dtype is not None:
        q = q.astype(compute_dtype)
    energy = jnp.einsum("bcn,bdn->bcd", q, q,
                        preferred_element_type=jnp.float32)
    energy_new = jnp.max(energy, axis=-1, keepdims=True) - energy
    attn = jax.nn.softmax(energy_new, axis=-1)
    if compute_dtype is not None:
        attn = attn.astype(compute_dtype)
    out = jnp.einsum("bcd,bdn->bcn", attn, q,
                     preferred_element_type=jnp.float32)
    out = out.reshape(B, C, H, W).astype(jnp.float32)
    return x + gamma[0] * out


if __name__ == "__main__":
    key = jax.random.PRNGKey(0)
    kx, kfb, kx2, kfb2 = jax.random.split(key, 4)
    B, C, W, H = 2, 4, 16, 16
    x = jax.random.normal(kx, (B, C, W, H), dtype=jnp.float32)
    fb = jax.random.normal(kfb, (B, C, W, H), dtype=jnp.float32)

    # Parameter init per the module __init__: gamma = zeros(1) => out == x.
    gamma0 = jnp.zeros((1,), dtype=jnp.float32)
    out0 = cam_module(x, fb, gamma0)
    jax.block_until_ready(out0)
    assert jnp.allclose(out0, x, atol=1e-6), "mismatch with gamma=0"

    gamma = jnp.full((1,), 0.5, dtype=jnp.float32)

    # Full f32 path vs the f32 reference (approx reciprocal => loose tol).
    out_f32 = cam_module(x, fb, gamma, compute_dtype=jnp.float32)
    ref_f32 = cam_reference(x, fb, gamma)
    assert jnp.allclose(out_f32, ref_f32, atol=5e-3, rtol=5e-3), \
        "mismatch: f32 path"

    # Default bf16 MXU path vs a precision-matched reference.
    ref_bf16 = cam_reference(x, fb, gamma, compute_dtype=jnp.bfloat16)
    out_bf16 = cam_module(x, fb, gamma)
    assert jnp.allclose(out_bf16, ref_bf16, atol=2e-2, rtol=2e-2), \
        "mismatch: bf16 path"

    # Multi-tile spatial streaming (K=2): with the fb VMEM cache ...
    out_t = cam_module(x, fb, gamma, spatial_tile=128, use_fb_cache=True)
    assert jnp.allclose(out_t, ref_bf16, atol=2e-2, rtol=2e-2), \
        "mismatch: tiled N with fb cache"
    # ... and re-streaming fb from HBM (the v7x-style no-cache path).
    out_nc = cam_module(x, fb, gamma, spatial_tile=128, use_fb_cache=False)
    assert jnp.allclose(out_nc, ref_bf16, atol=2e-2, rtol=2e-2), \
        "mismatch: tiled N without fb cache"

    # N not a multiple of 128 (zero-padding path) and K > 2 output streaming.
    B2, C2, W2, H2 = 1, 8, 24, 24          # N = 576 -> padded to 640, K = 5
    x2 = jax.random.normal(kx2, (B2, C2, W2, H2), dtype=jnp.float32)
    fb2 = jax.random.normal(kfb2, (B2, C2, W2, H2), dtype=jnp.float32)
    out2 = cam_module(x2, fb2, gamma, spatial_tile=128)
    ref2 = cam_reference(x2, fb2, gamma, compute_dtype=jnp.bfloat16)
    assert jnp.allclose(out2, ref2, atol=2e-2, rtol=2e-2), \
        "mismatch: padded N, K>2"

    jax.block_until_ready(out2)
    print("KERNEL_OK")
</pallas_src>

<mosaic_0001>
module attributes {stable_mosaic.version = 11 : i64} {
  func.func @kernel(%arg0: i32, %arg1: i32, %arg2: i32, %arg3: memref<1xf32, #tpu.memory_space<smem>>, %arg4: memref<1x4x256xf32, #tpu.memory_space<vmem>>, %arg5: memref<1x4x256xbf16, #tpu.memory_space<vmem>>, %arg6: memref<1x4x256xf32, #tpu.memory_space<vmem>>, %arg7: memref<4x4xf32, #tpu.memory_space<vmem>>, %arg8: memref<4x4xbf16, #tpu.memory_space<vmem>>) attributes {dimension_semantics = [#tpu.dimension_semantics<parallel>, #tpu.dimension_semantics<arbitrary>, #tpu.dimension_semantics<arbitrary>], iteration_bounds = array<i64: 2, 2, 1>, scalar_prefetch = 0 : i64, scratch_operands = 2 : i64, tpu.core_type = #tpu.core_type<tc>, window_params = [{transform_indices = @transform_0, window_bounds = array<i64: 1>}, {transform_indices = @transform_1, window_bounds = array<i64: 1, 4, 256>}, {transform_indices = @transform_2, window_bounds = array<i64: 1, 4, 256>}, {transform_indices = @transform_3, window_bounds = array<i64: 1, 4, 256>}]} {
    %c0_i32 = arith.constant 0 : i32
    %0 = arith.cmpi eq, %arg1, %c0_i32 : i32
    %1 = arith.extui %0 : i1 to i32
    %c0_i32_0 = arith.constant 0 : i32
    %2 = arith.cmpi ne, %1, %c0_i32_0 : i32
    scf.if %2 {
      %c0 = arith.constant 0 : index
      %c0_2 = arith.constant 0 : index
      %c0_3 = arith.constant 0 : index
      %6 = vector.load %arg5[%c0, %c0_2, %c0_3] : memref<1x4x256xbf16, #tpu.memory_space<vmem>>, vector<1x4x256xbf16>
      %7 = vector.shape_cast %6 : vector<1x4x256xbf16> to vector<4x256xbf16>
      %c0_i32_4 = arith.constant 0 : i32
      %8 = arith.cmpi eq, %arg2, %c0_i32_4 : i32
      %9 = arith.extui %8 : i1 to i32
      %c0_i32_5 = arith.constant 0 : i32
      %10 = arith.cmpi ne, %9, %c0_i32_5 : i32
      scf.if %10 {
        %cst_12 = arith.constant 0.000000e+00 : f32
        %18 = vector.broadcast %cst_12 : f32 to vector<4x4xf32>
        %c0_13 = arith.constant 0 : index
        %c0_14 = arith.constant 0 : index
        %19 = vector.load %arg7[%c0_13, %c0_14] : memref<4x4xf32, #tpu.memory_space<vmem>>, vector<4x4xf32>
        tpu.vector_store %arg7[%c0_13, %c0_14], %18 {strides = array<i32>} : memref<4x4xf32, #tpu.memory_space<vmem>>, vector<4x4xf32>,
      } else {
      }
      %c0_6 = arith.constant 0 : index
      %c0_7 = arith.constant 0 : index
      %11 = vector.load %arg7[%c0_6, %c0_7] : memref<4x4xf32, #tpu.memory_space<vmem>>, vector<4x4xf32>
      %cst = arith.constant dense<0.000000e+00> : vector<4x4xf32>
      %12 = tpu.matmul %7, %7, %cst {dimension_numbers = #tpu.dot_dimension_numbers<[1], [1], [0], [0], [0, 0, 1, 0], [], []>} : vector<4x256xbf16>, vector<4x256xbf16>, vector<4x4xf32> -> vector<4x4xf32>
      %13 = arith.addf %11, %12 : vector<4x4xf32>
      %c0_8 = arith.constant 0 : index
      %c0_9 = arith.constant 0 : index
      %14 = vector.load %arg7[%c0_8, %c0_9] : memref<4x4xf32, #tpu.memory_space<vmem>>, vector<4x4xf32>
      tpu.vector_store %arg7[%c0_8, %c0_9], %13 {strides = array<i32>} : memref<4x4xf32, #tpu.memory_space<vmem>>, vector<4x4xf32>,
      %c0_i32_10 = arith.constant 0 : i32
      %15 = arith.cmpi eq, %arg2, %c0_i32_10 : i32
      %16 = arith.extui %15 : i1 to i32
      %c0_i32_11 = arith.constant 0 : i32
      %17 = arith.cmpi ne, %16, %c0_i32_11 : i32
      scf.if %17 {
        %c0_12 = arith.constant 0 : index
        %c0_13 = arith.constant 0 : index
        %18 = vector.load %arg7[%c0_12, %c0_13] : memref<4x4xf32, #tpu.memory_space<vmem>>, vector<4x4xf32>
        %cst_14 = arith.constant dense<0x7F800000> : vector<4xf32>
        %19 = vector.multi_reduction <minimumf>, %18, %cst_14 [1] : vector<4x4xf32> to vector<4xf32>
        %20 = vector.shape_cast %19 : vector<4xf32> to vector<4x1xf32>
        %21 = vector.broadcast %20 : vector<4x1xf32> to vector<4x4xf32>
        %22 = arith.subf %21, %18 : vector<4x4xf32>
        %23 = math.exp %22 : vector<4x4xf32>
        %cst_15 = arith.constant dense<0.000000e+00> : vector<4xf32>
        %24 = vector.multi_reduction <add>, %23, %cst_15 [1] : vector<4x4xf32> to vector<4xf32>
        %25 = vector.shape_cast %24 : vector<4xf32> to vector<4x1xf32>
        %26 = tpu.reciprocal %25 {approx = true} : vector<4x1xf32> -> vector<4x1xf32>
        %27 = vector.broadcast %26 : vector<4x1xf32> to vector<4x4xf32>
        %28 = arith.mulf %23, %27 : vector<4x4xf32>
        %29 = arith.truncf %28 : vector<4x4xf32> to vector<4x4xbf16>
        %c0_16 = arith.constant 0 : index
        %c0_17 = arith.constant 0 : index
        %30 = vector.load %arg8[%c0_16, %c0_17] : memref<4x4xbf16, #tpu.memory_space<vmem>>, vector<4x4xbf16>
        tpu.vector_store %arg8[%c0_16, %c0_17], %29 {strides = array<i32>} : memref<4x4xbf16, #tpu.memory_space<vmem>>, vector<4x4xbf16>,
      } else {
      }
    } else {
    }
    %c1_i32 = arith.constant 1 : i32
    %3 = arith.cmpi eq, %arg1, %c1_i32 : i32
    %4 = arith.extui %3 : i1 to i32
    %c0_i32_1 = arith.constant 0 : i32
    %5 = arith.cmpi ne, %4, %c0_i32_1 : i32
    scf.if %5 {
      %c0 = arith.constant 0 : index
      %c0_2 = arith.constant 0 : index
      %c0_3 = arith.constant 0 : index
      %6 = vector.load %arg5[%c0, %c0_2, %c0_3] : memref<1x4x256xbf16, #tpu.memory_space<vmem>>, vector<1x4x256xbf16>
      %7 = vector.shape_cast %6 : vector<1x4x256xbf16> to vector<4x256xbf16>
      %c0_4 = arith.constant 0 : index
      %c0_5 = arith.constant 0 : index
      %8 = vector.load %arg8[%c0_4, %c0_5] : memref<4x4xbf16, #tpu.memory_space<vmem>>, vector<4x4xbf16>
      %cst = arith.constant dense<0.000000e+00> : vector<4x256xf32>
      %9 = tpu.matmul %8, %7, %cst {dimension_numbers = #tpu.dot_dimension_numbers<[1], [0], [0], [1], [0, 0, 1, 1], [], []>} : vector<4x4xbf16>, vector<4x256xbf16>, vector<4x256xf32> -> vector<4x256xf32>
      %c0_6 = arith.constant 0 : index
      %10 = memref.load %arg3[%c0_6] : memref<1xf32, #tpu.memory_space<smem>>
      %c0_7 = arith.constant 0 : index
      %c0_8 = arith.constant 0 : index
      %c0_9 = arith.constant 0 : index
      %11 = vector.load %arg4[%c0_7, %c0_8, %c0_9] : memref<1x4x256xf32, #tpu.memory_space<vmem>>, vector<1x4x256xf32>
      %12 = vector.shape_cast %11 : vector<1x4x256xf32> to vector<4x256xf32>
      %13 = vector.broadcast %10 : f32 to vector<4x256xf32>
      %14 = arith.mulf %13, %9 : vector<4x256xf32>
      %15 = arith.addf %12, %14 : vector<4x256xf32>
      %c0_10 = arith.constant 0 : index
      %c0_11 = arith.constant 0 : index
      %c0_12 = arith.constant 0 : index
      %16 = vector.load %arg6[%c0_10, %c0_11, %c0_12] : memref<1x4x256xf32, #tpu.memory_space<vmem>>, vector<1x4x256xf32>
      %17 = vector.shape_cast %16 : vector<1x4x256xf32> to vector<4x256xf32>
      %18 = vector.shape_cast %15 : vector<4x256xf32> to vector<1x4x256xf32>
      tpu.vector_store %arg6[%c0_10, %c0_11, %c0_12], %18 {strides = array<i32>} : memref<1x4x256xf32, #tpu.memory_space<vmem>>, vector<1x4x256xf32>,
    } else {
    }
    return
  }
  func.func @transform_0(%arg0: i32, %arg1: i32, %arg2: i32) -> i32 {
    %c0_i32 = arith.constant 0 : i32
    %c0_i32_0 = arith.constant 0 : i32
    return %c0_i32 : i32
  }
  func.func @transform_1(%arg0: i32, %arg1: i32, %arg2: i32) -> (i32, i32, i32) {
    %0 = arith.muli %arg2, %arg1 : i32
    %c0_i32 = arith.constant 0 : i32
    %c0_i32_0 = arith.constant 0 : i32
    return %arg0, %c0_i32, %0 : i32, i32, i32
  }
  func.func @transform_2(%arg0: i32, %arg1: i32, %arg2: i32) -> (i32, i32, i32) {
    %c0_i32 = arith.constant 0 : i32
    %c0_i32_0 = arith.constant 0 : i32
    return %arg0, %c0_i32, %arg2 : i32, i32, i32
  }
  func.func @transform_3(%arg0: i32, %arg1: i32, %arg2: i32) -> (i32, i32, i32) {
    %0 = arith.muli %arg2, %arg1 : i32
    %c0_i32 = arith.constant 0 : i32
    %c0_i32_0 = arith.constant 0 : i32
    return %arg0, %c0_i32, %0 : i32, i32, i32
  }
}

</mosaic_0001>

<llo_original>
// kernel: tpu_custom_call.1
$region0: #{tpu_custom_call.1}
  #allocation0 [shape = 'u32[]', space=smem, size = 0x4, offset = 0x4, fixed_abs, tag = 'smem constant byte address 0x4 - core index']
  #allocation1 [shape = 'u32[144,128]{1,0:T(1,128)}', space=vmem, size = 0x12000, scoped, tag = 'internal scratch']
  #allocation2 [shape = 'f32[4,4]{1,0:T(4,128)}', space=vmem, size = 0x800, scoped, tag = 'scratch operand']
  #allocation3 [shape = 'bf16[4,4]{1,0:T(4,128)(2,1)}', space=vmem, size = 0x400, scoped, tag = 'scratch operand']
  #allocation4 [shape = 'f32[1]{0:T(128)S(6)}', space=smem, size = 0x200, scoped, tag = 'scoped memory for tpu_custom_call.1']
  %s0 = inlined_call_operand.<no memory space> [shape: f32[1], index: 0, kind: input, shape index: {}]
  %s1 = inlined_call_operand.hbm [shape: f32[2,4,256], index: 1, kind: input, shape index: {}, may-alias: {1,3}]
  %s2 = inlined_call_operand.vmem [shape: bf16[2,4,256], index: 2, kind: input, shape index: {}]
  %s3 = inlined_call_operand.hbm [shape: f32[2,4,256], index: 3, kind: output, shape index: {}, may-alias: {1,3}]
  %s4 = sld [smem:[#allocation0]]
  $region65: #{tpu_custom_call.1} parent=0
    _
  %s6 = ssub.s32 1, %s4
  %s7 = scalar_select 0, %s6, %s4
  %8 = sst [smem:[#allocation4]] %s0
  $region1: #{tpu_custom_call.1} parent=0
    #allocation5 [shape = 'u8[8192]{0}', space=vmem, size = 0x2000, scoped, tag = 'input window, operand 1']
    #allocation6 [shape = 's32[2]{0}', space=sflag, size = 0x8, scoped, tag = 'scoped memory for tpu_custom_call.1']
    #allocation7 [shape = 's32[2]{0}', space=sflag, size = 0x8, scoped, tag = 'scoped memory for tpu_custom_call.1']
    #allocation8 [shape = 'u8[8192]{0}', space=vmem, size = 0x2000, scoped, tag = 'output window, operand 0']
    %9 = vsyncpa [#allocation6], 0
    %s10 = scalar_lea.sflag [#allocation6], 1
    %11 = vsyncpa %s10, 0
    %12 = vsyncpa [#allocation7], 0
    %s13 = scalar_lea.sflag [#allocation7], 1
    %14 = vsyncpa %s13, 0
    loop: start=0, step=1, limit=6
    $region2: #{tpu_custom_call.1} parent=1 // loop_pre_header
      _
    $region3: #{tpu_custom_call.1} parent=1 // loop_header
      %s16 = sphi 0, %s20
      %p17 = scmp.ge.s32.totalorder %s16, 6
      %s23 = sphi 0, %s42
      %s24 = sphi 0, %s38
      %s25 = sphi 0, %s34
      %s26 = sphi 0, %s23
      %s27 = sphi 0, %s24
      %s28 = sphi 0, %s25
      %s29 = sphi 0, %s26
      %s30 = sphi 0, %s27
      %s31 = sphi 0, %s28
      %s43 = sphi 0, %s43
      %s45 = sphi 0, %s43
      %s46 = sphi 0, %s45
      %s60 = sphi 0, %s46
      %s70 = sphi 0, %s72
      %s73 = sphi 0, %s70
      %s74 = sphi 0, %s73
      %s90 = sphi 0, %s74
      %s98 = sphi 0, %s100
      %s101 = sphi 0, %s98
      %s102 = sphi 0, %s101
      %s118 = sphi 0, %s102
      %s128 = sphi 0, %s130
      %s131 = sphi 0, %s128
      %s132 = sphi 0, %s131
      %s148 = sphi 0, %s132
    $region4: #{tpu_custom_call.1} parent=1 // loop_header_branch
      %19 = sbr.rel (%p17) target = $region8
    $region5: #{tpu_custom_call.1} parent=1 // loop_body
      %s21 = ssub.s32 %s16, 1
      %s22 = ssub.s32 %s16, 2
      %s32 = sadd.s32 1, %s25
      %p33 = scmp.ge.s32.totalorder %s32, 1
      %s34 = scalar_select %p33, 0, %s32
      %s35 = sadd.s32 1, %s24
      %s36 = scalar_select %p33, %s35, %s24
      %p37 = scmp.ge.s32.totalorder %s36, 2
      %s38 = scalar_select %p37, 0, %s36
      %s39 = sadd.s32 1, %s23
      %s40 = scalar_select %p37, %s39, %s23
      %p41 = scmp.ge.s32.totalorder %s40, 2
      %s42 = scalar_select %p41, 0, %s40
      %s44 = sadd.s32 %s43, 1
      %p47 = scmp.eq.s32.totalorder %s16, 3
      %p48 = scmp.ne.s32.totalorder %s43, %s45
      %p49 = scmp.eq.s32.totalorder %s16, 0
      %p50 = por %p48, %p49
      %p51 = scmp.ne.s32.totalorder %s43, %s45
      %p52 = scmp.eq.s32.totalorder %s21, 3
      %p53 = por %p51, %p52
      %p54 = scmp.ne.s32.totalorder %s45, %s46
      %p55 = scmp.eq.s32.totalorder %s21, 0
      %p56 = por %p54, %p55
      %p57 = scmp.ne.s32.totalorder %s45, %s46
      %p58 = scmp.eq.s32.totalorder %s22, 3
      %p59 = por %p57, %p58
      %p61 = scmp.ne.s32.totalorder %s46, %s60
      %p62 = scmp.eq.s32.totalorder %s22, 0
      %p63 = por %p61, %p62
      %s64 = smul.u32 %s25, %s24
      %s65 = smul.u32 %s34, %s38
      %s66 = ssub.s32 %s23, %s42
      %s67 = ssub.s32 %s64, %s65
      %s68 = sor.u32 %s66, %s67
      %p69 = scmp.eq.s32.totalorder %s68, 0
      %s71 = sadd.s32 %s70, 1
      %s72 = scalar_select %p69, %s70, %s71
      %p75 = pneg %p69
      %p76 = scmp.eq.s32.totalorder %s16, 3
      %p77 = por %p75, %p76
      %p78 = scmp.ne.s32.totalorder %s70, %s73
      %p79 = scmp.eq.s32.totalorder %s16, 0
      %p80 = por %p78, %p79
      %p81 = scmp.ne.s32.totalorder %s70, %s73
      %p82 = scmp.eq.s32.totalorder %s21, 3
      %p83 = por %p81, %p82
      %p84 = scmp.ne.s32.totalorder %s73, %s74
      %p85 = scmp.eq.s32.totalorder %s21, 0
      %p86 = por %p84, %p85
      %p87 = scmp.ne.s32.totalorder %s73, %s74
      %p88 = scmp.eq.s32.totalorder %s22, 3
      %p89 = por %p87, %p88
      %p91 = scmp.ne.s32.totalorder %s74, %s90
      %p92 = scmp.eq.s32.totalorder %s22, 0
      %p93 = por %p91, %p92
      %s94 = ssub.s32 %s23, %s42
      %s95 = ssub.s32 %s25, %s34
      %s96 = sor.u32 %s94, %s95
      %p97 = scmp.eq.s32.totalorder %s96, 0
      %s99 = sadd.s32 %s98, 1
      %s100 = scalar_select %p97, %s98, %s99
      %p103 = pneg %p97
      %p104 = scmp.eq.s32.totalorder %s16, 3
      %p105 = por %p103, %p104
      %p106 = scmp.ne.s32.totalorder %s98, %s101
      %p107 = scmp.eq.s32.totalorder %s16, 0
      %p108 = por %p106, %p107
      %p109 = scmp.ne.s32.totalorder %s98, %s101
      %p110 = scmp.eq.s32.totalorder %s21, 3
      %p111 = por %p109, %p110
      %p112 = scmp.ne.s32.totalorder %s101, %s102
      %p113 = scmp.eq.s32.totalorder %s21, 0
      %p114 = por %p112, %p113
      %p115 = scmp.ne.s32.totalorder %s101, %s102
      %p116 = scmp.eq.s32.totalorder %s22, 3
      %p117 = por %p115, %p116
      %p119 = scmp.ne.s32.totalorder %s102, %s118
      %p120 = scmp.eq.s32.totalorder %s22, 0
      %p121 = por %p119, %p120
      %s122 = smul.u32 %s25, %s24
      %s123 = smul.u32 %s34, %s38
      %s124 = ssub.s32 %s23, %s42
      %s125 = ssub.s32 %s122, %s123
      %s126 = sor.u32 %s124, %s125
      %p127 = scmp.eq.s32.totalorder %s126, 0
      %s129 = sadd.s32 %s128, 1
      %s130 = scalar_select %p127, %s128, %s129
      %p133 = pneg %p127
      %p134 = scmp.eq.s32.totalorder %s16, 3
      %p135 = por %p133, %p134
      %p136 = scmp.ne.s32.totalorder %s128, %s131
      %p137 = scmp.eq.s32.totalorder %s16, 0
      %p138 = por %p136, %p137
      %p139 = scmp.ne.s32.totalorder %s128, %s131
      %p140 = scmp.eq.s32.totalorder %s21, 3
      %p141 = por %p139, %p140
      %p142 = scmp.ne.s32.totalorder %s131, %s132
      %p143 = scmp.eq.s32.totalorder %s21, 0
      %p144 = por %p142, %p143
      %p145 = scmp.ne.s32.totalorder %s131, %s132
      %p146 = scmp.eq.s32.totalorder %s22, 3
      %p147 = por %p145, %p146
      %p149 = scmp.ne.s32.totalorder %s132, %s148
      %p150 = scmp.eq.s32.totalorder %s22, 0
      %p151 = por %p149, %p150
      %p152 = scmp.le.s32.totalorder 1, %s16
      %p153 = scmp.lt.s32.totalorder %s16, 5
      %p154 = pnand %p152, %p153
      %p155 = pneg %p154
      // Predicated region
      $region9: #{tpu_custom_call.1} parent=5 // pred_check
        _
      $region10: #{tpu_custom_call.1} parent=5 // pred_check_branch
        %157 = sbr.rel (%p154) target = $region12
      $region11: #{tpu_custom_call.1} parent=5 // pred_region
        %s158 = ssub.s32 %s16, 1
        // Predicated region
        $region13: #{tpu_custom_call.1} parent=11 // pred_check
          %p159 = pneg %p56
        $region14: #{tpu_custom_call.1} parent=11 // pred_check_branch
          %161 = sbr.rel (%p159) target = $region16
        $region15: #{tpu_custom_call.1} parent=11 // pred_region
          _
        $region16: #{tpu_custom_call.1} parent=11 // pred_fallthru
          _
      $region12: #{tpu_custom_call.1} parent=5 // pred_fallthru
        _
      %p162 = scmp.lt.s32.totalorder %s16, 4
      // Predicated region
      $region17: #{tpu_custom_call.1} parent=5 // pred_check
        %p163 = pneg %p162
      $region18: #{tpu_custom_call.1} parent=5 // pred_check_branch
        %165 = sbr.rel (%p163) target = $region20
      $region19: #{tpu_custom_call.1} parent=5 // pred_region
        // Predicated region
        $region21: #{tpu_custom_call.1} parent=19 // pred_check
          %p166 = pneg %p80
        $region22: #{tpu_custom_call.1} parent=19 // pred_check_branch
          %168 = sbr.rel (%p166) target = $region24
        $region23: #{tpu_custom_call.1} parent=19 // pred_region
          %s169 = sand.u32 %s70, 1
          %s170 = scalar_lea.sflag [#allocation6], %s169
          %s171 = sand.u32 %s70, 1
          %s172 = smul.addr %s171, 8
          %s173 = scalar_lea.vmem [#allocation5], %s172
          %s174 = smul.u32 %s25, %s24
          %s175 = smul.u32 2, %s174
          %s177 = ssub.s32 128, 128
          %178 = vsyncadd %s170, %s177
          %s179 = smul.addr %s23, 2
          %s180 = sadd.s32 %s175, %s179
          %s181 = smul.addr %s180, 64
          %s182 = scalar_lea.hbm %s1, %s181
          %s184 = sshll.u32 %s173, 4
          %s185 = int_to_ptr.vmem [resolvable:$true] %s184
          %187 = dma.hbm_to_vmem [thread:$0]  %s182, 128, %s185, %s170
        $region24: #{tpu_custom_call.1} parent=19 // pred_fallthru
          _
        // Predicated region
        $region25: #{tpu_custom_call.1} parent=19 // pred_check
          %p188 = pneg %p108
        $region26: #{tpu_custom_call.1} parent=19 // pred_check_branch
          %190 = sbr.rel (%p188) target = $region28
        $region27: #{tpu_custom_call.1} parent=19 // pred_region
          %s191 = smul.u32 2, %s25
          %p192 = scmp.lt.s32.totalorder %s23, 1
          %s193 = scalar_select %p192, %s23, 1
          %p194 = scmp.lt.s32.totalorder %s191, 1
          %s195 = scalar_select %p194, %s191, 1
          %s196 = smul.addr %s193, 2
          %s197 = sadd.s32 %s195, %s196
          %s198 = smul.addr %s197, 2
          %s199 = scalar_lea.vmem %s2, %s198
          %s200 = smul.u32 2, %s25
        $region28: #{tpu_custom_call.1} parent=19 // pred_fallthru
          _
      $region20: #{tpu_custom_call.1} parent=5 // pred_fallthru
        _
      %p201 = scmp.le.s32.totalorder 1, %s16
      %p202 = scmp.lt.s32.totalorder %s16, 5
      %p203 = pnand %p201, %p202
      %p204 = pneg %p203
      // Predicated region
      $region29: #{tpu_custom_call.1} parent=5 // pred_check
        _
      $region30: #{tpu_custom_call.1} parent=5 // pred_check_branch
        %206 = sbr.rel (%p203) target = $region32
      $region31: #{tpu_custom_call.1} parent=5 // pred_region
        %s207 = ssub.s32 %s16, 1
        %s208 = sand.u32 %s73, 1
        %s209 = scalar_lea.sflag [#allocation6], %s208
        %s210 = sand.u32 %s73, 1
        %s211 = smul.addr %s210, 8
        %s212 = scalar_lea.vmem [#allocation5], %s211
        // Predicated region
        $region33: #{tpu_custom_call.1} parent=31 // pred_check
          %p213 = pneg %p86
        $region34: #{tpu_custom_call.1} parent=31 // pred_check_branch
          %215 = sbr.rel (%p213) target = $region36
        $region35: #{tpu_custom_call.1} parent=31 // pred_region
          %216 = dma.done %s209, 128
        $region36: #{tpu_custom_call.1} parent=31 // pred_fallthru
          _
        %p217 = pneg %p56
        %p218 = pneg %p53
        %s219 = sand.u32 %s73, 1
        %s220 = scalar_lea.sflag [#allocation6], %s219
        %s221 = sand.u32 %s73, 1
        %s222 = smul.addr %s221, 8
        %s223 = scalar_lea.vmem [#allocation5], %s222
        %p224 = pneg %p86
        %p225 = pneg %p83
        %s226 = smul.u32 2, %s28
        %p227 = scmp.lt.s32.totalorder %s26, 1
        %s228 = scalar_select %p227, %s26, 1
        %p229 = scmp.lt.s32.totalorder %s226, 1
        %s230 = scalar_select %p229, %s226, 1
        %s231 = smul.addr %s228, 2
        %s232 = sadd.s32 %s230, %s231
        %s233 = smul.addr %s232, 2
        %s234 = scalar_lea.vmem %s2, %s233
        %p235 = pneg %p114
        %p236 = pneg %p111
        %p237 = pneg %p144
        %p238 = pneg %p141
        %s239 = sand.u32 %s131, 1
        %s240 = scalar_lea.sflag [#allocation7], %s239
        %s241 = sand.u32 %s131, 1
        %s242 = smul.addr %s241, 8
        %s243 = scalar_lea.vmem [#allocation8], %s242
        %s244 = smul.u32 %s28, %s27
        %s245 = smul.u32 2, %s244
        %s246 = smul.u32 2, %s28
        %p247 = scmp.lt.s32.totalorder %s26, 1
        %s248 = scalar_select %p247, %s26, 1
        %p249 = scmp.lt.s32.totalorder %s246, 1
        %s250 = scalar_select %p249, %s246, 1
        %s251 = smul.addr %s248, 2
        %s252 = sadd.s32 %s250, %s251
        %s253 = smul.addr %s252, 2
        %s254 = scalar_lea.vmem %s2, %s253
        %s255 = smul.u32 2, %s28
        %s256 = smul.u32 %s28, %s27
        %s257 = smul.u32 2, %s256
        %p259 = scmp.eq.s32.totalorder %s27, 0
        // Predicated region
        $region37: #{tpu_custom_call.1} parent=31 // pred_check
          %p260 = pneg %p259
        $region38: #{tpu_custom_call.1} parent=31 // pred_check_branch
          %262 = sbr.rel (%p260) target = $region40
        $region39: #{tpu_custom_call.1} parent=31 // pred_region
          %v263 = vld [vmem:[%s254] sm:$0xf]
          %p264 = scmp.eq.s32.totalorder %s28, 0
          // Predicated region
          $region41: #{tpu_custom_call.1} parent=39 // pred_check
            %p265 = pneg %p264
          $region42: #{tpu_custom_call.1} parent=39 // pred_check_branch
            %267 = sbr.rel (%p265) target = $region44
          $region43: #{tpu_custom_call.1} parent=39 // pred_region
            %vm268 = vcmask 27648
            %269 = vst.msk [vmem:[#allocation2] sm:$0xf] %vm268, 0.0
          $region44: #{tpu_custom_call.1} parent=39 // pred_fallthru
            _
          %v270 = vld [vmem:[#allocation2] sm:$0xf]
          %v273 = vunpack.c.l.s4 1983009808
          %v274 = vunpack.c.0.s8 %v273
          %v275 = vlaneseq
          %v276 = vshrl.u32 %v275, 7
          %v277 = vsub.s32 %v274, %v276
          %v278 = vrot.slane %v263, %v277
          %v279 = vcombine.high %v278, %v278
          %282 = vmatprep.subr.bf16.mxu0 %v279
          %283 = vmatpush1.bf16.xpose.msra.mxu0 %v278
          %284 = vmatprep.subr.bf16.mxu0 0
          %285 = vmatpush1.bf16.xpose.msra.mxu0 0
          %286 = vmatprep.subr.bf16.mxu0 0
          %287 = vmatpush1.bf16.xpose.msra.mxu0 0
          %288 = vmatprep.subr.bf16.mxu0 0
          %289 = vmatpush1.bf16.xpose.msra.mxu0 0
          %290 = vmatprep.subr.bf16.mxu0 0
          %291 = vmatpush1.bf16.xpose.msra.mxu0 0
          %292 = vmatprep.subr.bf16.mxu0 0
          %293 = vmatpush1.bf16.xpose.msra.mxu0 0
          %294 = vmatprep.subr.bf16.mxu0 0
          %295 = vmatpush1.bf16.xpose.msra.mxu0 0
          %296 = vmatprep.subr.bf16.mxu0 0
          %297 = vmatpush1.bf16.xpose.msra.mxu0 0
          %298 = vmatprep.subr.bf16.mxu0 0
          %299 = vmatpush1.bf16.xpose.msra.mxu0 0
          %300 = vmatprep.subr.bf16.mxu0 0
          %301 = vmatpush1.bf16.xpose.msra.mxu0 0
          %302 = vmatprep.subr.bf16.mxu0 0
          %303 = vmatpush1.bf16.xpose.msra.mxu0 0
          %304 = vmatprep.subr.bf16.mxu0 0
          %305 = vmatpush1.bf16.xpose.msra.mxu0 0
          %306 = vmatprep.subr.bf16.mxu0 0
          %307 = vmatpush1.bf16.xpose.msra.mxu0 0
          %308 = vmatprep.subr.bf16.mxu0 0
          %309 = vmatpush1.bf16.xpose.msra.mxu0 0
          %310 = vmatprep.subr.bf16.mxu0 0
          %311 = vmatpush1.bf16.xpose.msra.mxu0 0
          %312 = vmatprep.subr.bf16.mxu0 0
          %313 = vmatpush1.bf16.xpose.msra.mxu0 0
          %314 = vmatprep.mubr.bf16.mxu0 %v279
          %315 = vmatmul.mubr.bf16.gmra.mrb[0].mxu0 %v278
          %v316 = vpop.f32.mrb[0].mxu0
          %v317 = vadd.f32 0.0, %v316
          %v318 = vpop.f32.mrb[0].mxu0
          %v319 = vpop.f32.mrb[0].mxu0
          %v320 = vpop.f32.mrb[0].mxu0
          %321 = vdwg.mxu0
          %v322 = vadd.f32 %v270, %v317
          %vm323 = vcmask 27648
          %324 = vst.msk [vmem:[#allocation2] sm:$0xf] %vm323, %v322
          // Predicated region
          $region45: #{tpu_custom_call.1} parent=39 // pred_check
            %p325 = pneg %p264
          $region46: #{tpu_custom_call.1} parent=39 // pred_check_branch
            %327 = sbr.rel (%p325) target = $region48
          $region47: #{tpu_custom_call.1} parent=39 // pred_region
            %v328 = vld [vmem:[#allocation2] sm:$0xf]
            %v329 = vsel %vm323, %v328, inf
            %330 = vmin.xlane.f32.xlu0 %v329
            %v331 = vpop.xlane.xlu0 %330
            %v332 = vsub.f32 %v331, %v328
            %v333 = vmul.f32 %v332, 1.442695
            %v334 = vpow.pop %v333
            %v335 = vsel %vm323, %v334, 0.0
            %336 = vadd.xlane.f32.xlu0 %v335
            %v337 = vpop.xlane.xlu0 %336
            %v338 = vrcp.pop %v337
            %v339 = vmul.f32 %v334, %v338
            %v340 = vpack.c.bf16 %v339, %v339
            %vm341 = vcmask 25600
            %342 = vst.msk [vmem:[#allocation3] sm:$0x3] %vm341, %v340
          $region48: #{tpu_custom_call.1} parent=39 // pred_fallthru
            _
        $region40: #{tpu_custom_call.1} parent=31 // pred_fallthru
          _
        %p343 = scmp.eq.s32.totalorder %s27, 1
        // Predicated region
        $region49: #{tpu_custom_call.1} parent=31 // pred_check
          %p344 = pneg %p343
        $region50: #{tpu_custom_call.1} parent=31 // pred_check_branch
          %346 = sbr.rel (%p344) target = $region52
        $region51: #{tpu_custom_call.1} parent=31 // pred_region
          %v347 = vld [vmem:[%s254] sm:$0xf]
          %v348 = vld [vmem:[#allocation3] sm:$0x3]
          %v351 = vunpack.c.l.s4 1983009808
          %v352 = vunpack.c.0.s8 %v351
          %v353 = vlaneseq
          %v354 = vshrl.u32 %v353, 7
          %v355 = vsub.s32 %v352, %v354
          %v356 = vrot.slane %v347, %v355
          %v357 = vcombine.high %v356, %v356
          %vm358 = vcmask 31744
          %v360 = vsel %vm358, %v348, 0
          %vm362 = vcmask 1041408
          %v364 = vsel %vm362, %v356, 0
          %v367 = vsel %vm362, %v357, 0
          %369 = vmatprep.subr.bf16.mxu0 %v367
          %370 = vmatpush1.bf16.msra.mxu0 %v364
          %371 = vmatprep.subr.bf16.mxu0 0
          %372 = vmatpush1.bf16.msra.mxu0 0
          %373 = vmatprep.subr.bf16.mxu0 0
          %374 = vmatpush1.bf16.msra.mxu0 0
          %375 = vmatprep.subr.bf16.mxu0 0
          %376 = vmatpush1.bf16.msra.mxu0 0
          %377 = vmatprep.subr.bf16.mxu0 0
          %378 = vmatpush1.bf16.msra.mxu0 0
          %379 = vmatprep.subr.bf16.mxu0 0
          %380 = vmatpush1.bf16.msra.mxu0 0
          %381 = vmatprep.subr.bf16.mxu0 0
          %382 = vmatpush1.bf16.msra.mxu0 0
          %383 = vmatprep.subr.bf16.mxu0 0
          %384 = vmatpush1.bf16.msra.mxu0 0
          %385 = vmatprep.subr.bf16.mxu0 0
          %386 = vmatpush1.bf16.msra.mxu0 0
          %387 = vmatprep.subr.bf16.mxu0 0
          %388 = vmatpush1.bf16.msra.mxu0 0
          %389 = vmatprep.subr.bf16.mxu0 0
          %390 = vmatpush1.bf16.msra.mxu0 0
          %391 = vmatprep.subr.bf16.mxu0 0
          %392 = vmatpush1.bf16.msra.mxu0 0
          %393 = vmatprep.subr.bf16.mxu0 0
          %394 = vmatpush1.bf16.msra.mxu0 0
          %395 = vmatprep.subr.bf16.mxu0 0
          %396 = vmatpush1.bf16.msra.mxu0 0
          %397 = vmatprep.subr.bf16.mxu0 0
          %398 = vmatpush1.bf16.msra.mxu0 0
          %399 = vmatprep.subr.bf16.mxu0 0
          %400 = vmatpush1.bf16.msra.mxu0 0
          %401 = vmatprep.mubr.bf16.mxu0 0
          %402 = vmatmul.mubr.bf16.gmra.mrb[0].mxu0 %v360
          %v403 = vpop.f32.mrb[0].mxu0
          %v404 = vadd.f32 0.0, %v403
          %v405 = vpop.f32.mrb[0].mxu0
          %v406 = vadd.f32 0.0, %v405
          %v407 = vpop.f32.mrb[0].mxu0
          %v408 = vpop.f32.mrb[0].mxu0
          %409 = vdwg.mxu0
          %s410 = sld [smem:[#allocation4]]
          %v411 = vld [vmem:[%s212] sm:$0xff]
          %v412 = vstv %s410
          %v413 = vmul.f32 %v412, %v404
          %v414 = vmul.f32 %v412, %v406
          %v417 = vcombine.low %v413, %v414
          %v419 = vadd.f32 %v411, %v417
          %420 = vst [vmem:[%s243] sm:$0xff] %v419
        $region52: #{tpu_custom_call.1} parent=31 // pred_fallthru
          _
        %s421 = sand.u32 %s131, 1
        %s422 = scalar_lea.sflag [#allocation7], %s421
        %s423 = sand.u32 %s131, 1
        %s424 = smul.addr %s423, 8
        %s425 = scalar_lea.vmem [#allocation8], %s424
        // Predicated region
        $region53: #{tpu_custom_call.1} parent=31 // pred_check
          %p426 = pneg %p141
        $region54: #{tpu_custom_call.1} parent=31 // pred_check_branch
          %428 = sbr.rel (%p426) target = $region56
        $region55: #{tpu_custom_call.1} parent=31 // pred_region
          %s429 = smul.u32 %s28, %s27
          %s430 = smul.u32 2, %s429
          %s432 = ssub.s32 128, 128
          %433 = vsyncadd %s422, %s432
          %s434 = smul.addr %s26, 2
          %s435 = sadd.s32 %s430, %s434
          %s436 = smul.addr %s435, 64
          %s437 = scalar_lea.hbm %s3, %s436
          %s439 = sshll.u32 %s425, 4
          %s440 = int_to_ptr.vmem [resolvable:$true] %s439
          %442 = dma.vmem_to_hbm [thread:$0]  %s440, 128, %s437, %s422
        $region56: #{tpu_custom_call.1} parent=31 // pred_fallthru
          _
      $region32: #{tpu_custom_call.1} parent=5 // pred_fallthru
        _
      %p443 = scmp.le.s32.totalorder 2, %s16
      // Predicated region
      $region57: #{tpu_custom_call.1} parent=5 // pred_check
        %p444 = pneg %p443
      $region58: #{tpu_custom_call.1} parent=5 // pred_check_branch
        %446 = sbr.rel (%p444) target = $region60
      $region59: #{tpu_custom_call.1} parent=5 // pred_region
        %s447 = ssub.s32 %s16, 2
        // Predicated region
        $region61: #{tpu_custom_call.1} parent=59 // pred_check
          %p448 = pneg %p147
        $region62: #{tpu_custom_call.1} parent=59 // pred_check_branch
          %450 = sbr.rel (%p448) target = $region64
        $region63: #{tpu_custom_call.1} parent=59 // pred_region
          %s451 = sand.u32 %s132, 1
          %s452 = scalar_lea.sflag [#allocation7], %s451
          %s453 = sand.u32 %s132, 1
          %s454 = smul.addr %s453, 8
          %s455 = scalar_lea.vmem [#allocation8], %s454
          %456 = dma.done %s452, 128
        $region64: #{tpu_custom_call.1} parent=59 // pred_fallthru
          _
      $region60: #{tpu_custom_call.1} parent=5 // pred_fallthru
        _
    $region6: #{tpu_custom_call.1} parent=1 // loop_footer
      %s20 = sadd.s32 1, %s16
    $region7: #{tpu_custom_call.1} parent=1 // loop_footer_branch
      %15 = sbr.rel target = $region3
    $region8: #{tpu_custom_call.1} parent=1 // loop_exit
      _
    %457 = vsyncpa [#allocation6], 1
    %s458 = scalar_lea.sflag [#allocation6], 1
    %459 = vsyncpa %s458, 1
    %460 = vsyncpa [#allocation7], 1
    %s461 = scalar_lea.sflag [#allocation7], 1
    %462 = vsyncpa %s461, 1

</llo_original>
